<compile_context>
chip_gen: v7x
topology: tpu7x:2x2x1
jax: 0.10.0
libtpu: 0.0.40
codegen_flags: <defaults>
</compile_context>

<pallas_src>
import numpy as np
import jax
import jax.numpy as jnp
from jax.experimental import pallas as pl
from jax.experimental.pallas import tpu as pltpu

MAX_SEQ_LENGTH = 200
OUTPUT_DIM = 512  # hard-coded in the PyTorch positional_encoding()


def _round_up(x, m):
    return (x + m - 1) // m * m


def positional_encoding(max_seq_length=MAX_SEQ_LENGTH, output_dim=OUTPUT_DIM):
    """Replicates ComputeEmbeddings.positional_encoding -> (1, 200, 512) f32."""
    pos = np.arange(max_seq_length, dtype=np.float64)[:, None]          # (S_max, 1)
    idx = np.arange(output_dim // 2, dtype=np.float64)[None, :]         # (1, D/2)
    denom = pos / np.power(10000.0, 2.0 * idx / output_dim)             # (S_max, D/2)
    pe = np.zeros((max_seq_length, output_dim), dtype=np.float32)
    pe[:, 0::2] = np.sin(denom).astype(np.float32)
    pe[:, 1::2] = np.cos(denom).astype(np.float32)
    return jnp.asarray(pe)[None, :, :]                                  # (1, S_max, D)


def _make_gather_kernel(ts, s_pad, vocab_size):
    def kernel(ids_ref, pos_ref, table_ref, out_ref, gbuf, sem):
        # ids_ref  : SMEM (B * S_pad,) int32   -- scalar-prefetched token ids
        # pos_ref  : VMEM (TS, D)              -- positional rows of this seq tile
        # table_ref: HBM  (V, D)               -- full embedding table (pl.ANY)
        # out_ref  : VMEM (TS, D)              -- output block (batch dim squeezed)
        # gbuf     : VMEM (TS, D) scratch      -- gathered embedding rows
        # sem      : DMA semaphore (1,)
        b = pl.program_id(0)
        j = pl.program_id(1)
        base = b * s_pad + j * ts

        # Issue one row DMA per token; all copies are in flight concurrently.
        @pl.loop(0, ts)
        def _(r):
            tok = ids_ref[base + r]
            # Clamp out-of-range ids so a bad input cannot fault the DMA.
            tok = jnp.clip(tok, 0, vocab_size - 1)
            pltpu.make_async_copy(
                table_ref.at[pl.ds(tok, 1)], gbuf.at[pl.ds(r, 1)], sem.at[0]
            ).start()

        # All copies share one semaphore and have identical shapes, so waiting
        # `ts` times with a matching descriptor drains every completion.
        @pl.loop(0, ts)
        def _(r):
            pltpu.make_async_copy(
                table_ref.at[pl.ds(0, 1)], gbuf.at[pl.ds(0, 1)], sem.at[0]
            ).wait()

        # Positional add on the VPU (exact; no MXU involvement anywhere).
        out_ref[...] = gbuf[...] + pos_ref[...]

    return kernel


def compute_embeddings(token_ids, embed_table, pos_embed, *, seq_tile=256):
    """Pallas implementation of ComputeEmbeddings.forward.

    token_ids  : (B, S) int32
    embed_table: (V, D) float32
    pos_embed  : (1, S_max, D) float32
    returns    : (B, S, D) float32  ==  embed_table[token_ids] + pos_embed[:, :S, :]
    """
    B, S = token_ids.shape
    V, D = embed_table.shape
    _, S_max, D_pos = pos_embed.shape
    if S > S_max or D != D_pos:
        raise ValueError("sequence longer than positional table or d_model mismatch")
    if D % 128 != 0:
        raise ValueError("d_model must be a multiple of 128 (module uses 512)")

    # Sequence tile (multiple of 8 for the (8,128) BlockSpec rule); with the
    # module's cap of S <= 200 a full batch row usually fits in one tile.
    TS = min(_round_up(seq_tile, 8), _round_up(S, 8))
    S_pad = _round_up(S, TS)

    ids = token_ids.astype(jnp.int32)
    if S_pad != S:
        ids = jnp.pad(ids, ((0, 0), (0, S_pad - S)))        # padded rows -> token 0
    ids_flat = ids.reshape(B * S_pad)

    pos = pos_embed[0, :S, :].astype(embed_table.dtype)
    if S_pad != S:
        pos = jnp.pad(pos, ((0, S_pad - S), (0, 0)))

    block_bytes = TS * D * np.dtype(embed_table.dtype).itemsize
    grid = (B, S_pad // TS)

    # TODO(synk): for very long sequence tiles, chunk / double-buffer the row
    # DMAs to cap the number of in-flight descriptors per grid step.
    out = pl.pallas_call(
        _make_gather_kernel(TS, S_pad, V),
        out_shape=jax.ShapeDtypeStruct((B, S_pad, D), embed_table.dtype),
        grid_spec=pltpu.PrefetchScalarGridSpec(
            num_scalar_prefetch=1,
            grid=grid,
            in_specs=[
                # Positional rows for the current sequence tile (VPU add operand).
                pl.BlockSpec((TS, D), lambda b, j, ids: (j, 0)),
                # Embedding table stays in HBM; rows gathered by manual DMA.
                pl.BlockSpec(memory_space=pl.ANY),
            ],
            out_specs=pl.BlockSpec((None, TS, D), lambda b, j, ids: (b, j, 0)),
            scratch_shapes=[
                pltpu.VMEM((TS, D), embed_table.dtype),     # gather buffer
                pltpu.SemaphoreType.DMA((1,)),
            ],
        ),
        compiler_params=pltpu.CompilerParams(
            dimension_semantics=("parallel", "parallel"),
            # Actual footprint is ~5 blocks (2x pos + 2x out double-buffered +
            # 1x gather scratch); leave generous headroom but stay far below
            # v7x's 64 MiB physical per-core VMEM.
            vmem_limit_bytes=int(8 * block_bytes + (8 << 20)),
        ),
    )(ids_flat, pos, embed_table)

    if S_pad != S:
        out = out[:, :S, :]
    return out


if __name__ == "__main__":
    pos_embed = positional_encoding()  # (1, 200, 512)
    d_model = OUTPUT_DIM               # forward requires d_model == 512

    key = jax.random.PRNGKey(0)
    k_ids, k_embed, k_ids2, k_embed2 = jax.random.split(key, 4)

    # --- test 1: small shapes from the module spec ---
    vocab_size, batch, seq = 32, 2, 8
    token_ids = jax.random.randint(k_ids, (batch, seq), 0, vocab_size, dtype=jnp.int32)
    embed_table = jax.random.normal(k_embed, (vocab_size, d_model), dtype=jnp.float32)

    out = compute_embeddings(token_ids, embed_table, pos_embed)
    out = jax.block_until_ready(out)
    ref = embed_table[token_ids] + pos_embed[:, :seq, :]
    assert out.shape == (batch, seq, d_model)
    np.testing.assert_allclose(np.asarray(out), np.asarray(ref), rtol=1e-6, atol=1e-6)

    # --- test 2: multi-tile sequence grid, row padding, and a larger vocab
    #             (table never becomes VMEM-resident) ---
    vocab2, batch2, seq2 = 1000, 3, 40
    token_ids2 = jax.random.randint(k_ids2, (batch2, seq2), 0, vocab2, dtype=jnp.int32)
    embed_table2 = jax.random.normal(k_embed2, (vocab2, d_model), dtype=jnp.float32)
    out2 = compute_embeddings(token_ids2, embed_table2, pos_embed, seq_tile=16)
    out2 = jax.block_until_ready(out2)
    ref2 = embed_table2[token_ids2] + pos_embed[:, :seq2, :]
    np.testing.assert_allclose(np.asarray(out2), np.asarray(ref2), rtol=1e-6, atol=1e-6)

    print("KERNEL_OK")
</pallas_src>

<mosaic_0001>
module attributes {stable_mosaic.version = 11 : i64} {
  func.func @kernel(%arg0: i32, %arg1: i32, %arg2: memref<16xi32, #tpu.memory_space<smem>>, %arg3: memref<8x512xf32, #tpu.memory_space<vmem>>, %arg4: memref<32x512xf32, #tpu.memory_space<any>>, %arg5: memref<1x8x512xf32, #tpu.memory_space<vmem>>, %arg6: memref<8x512xf32, #tpu.memory_space<vmem>>, %arg7: memref<1x!tpu.dma_semaphore, #tpu.memory_space<semaphore_mem>>) attributes {dimension_semantics = [#tpu.dimension_semantics<parallel>, #tpu.dimension_semantics<parallel>], iteration_bounds = array<i64: 2, 1>, scalar_prefetch = 1 : i64, scratch_operands = 2 : i64, tpu.core_type = #tpu.core_type<tc>, window_params = [{transform_indices = @transform_0, window_bounds = array<i64: 8, 512>}, {}, {transform_indices = @transform_2, window_bounds = array<i64: 1, 8, 512>}]} {
    %c8_i32 = arith.constant 8 : i32
    %0 = arith.muli %arg0, %c8_i32 : i32
    %c8_i32_0 = arith.constant 8 : i32
    %1 = arith.muli %arg1, %c8_i32_0 : i32
    %2 = arith.addi %0, %1 : i32
    %c0_i32 = arith.constant 0 : i32
    %c8_i32_1 = arith.constant 8 : i32
    %3 = arith.addi %c0_i32, %c8_i32_1 : i32
    %c1_i32 = arith.constant 1 : i32
    scf.for %arg8 = %c0_i32 to %3 step %c1_i32  : i32 {
      %c1_i32_12 = arith.constant 1 : i32
      %11 = arith.muli %arg8, %c1_i32_12 : i32
      %c0_i32_13 = arith.constant 0 : i32
      %12 = arith.addi %c0_i32_13, %11 : i32
      %13 = arith.addi %2, %12 : i32
      %14 = arith.index_cast %13 : i32 to index
      %15 = memref.load %arg2[%14] : memref<16xi32, #tpu.memory_space<smem>>
      %c0_i32_14 = arith.constant 0 : i32
      %c31_i32 = arith.constant 31 : i32
      %16 = arith.maxsi %c0_i32_14, %15 : i32
      %17 = arith.minsi %c31_i32, %16 : i32
      %c0_i32_15 = arith.constant 0 : i32
      %c0_i32_16 = arith.constant 0 : i32
      %18 = tpu.memref_slice %arg4[%17, %c0_i32_16] : memref<32x512xf32, #tpu.memory_space<any>> -> memref<1x512xf32, #tpu.memory_space<any>>
      %c0_i32_17 = arith.constant 0 : i32
      %19 = tpu.memref_slice %arg6[%12, %c0_i32_17] : memref<8x512xf32, #tpu.memory_space<vmem>> -> memref<1x512xf32, #tpu.memory_space<vmem>>
      %20 = tpu.memref_slice %arg7[%c0_i32_15] : memref<1x!tpu.dma_semaphore, #tpu.memory_space<semaphore_mem>> -> memref<1x!tpu.dma_semaphore, #tpu.memory_space<semaphore_mem>>
      %21 = tpu.memref_squeeze %20 : memref<1x!tpu.dma_semaphore, #tpu.memory_space<semaphore_mem>> -> memref<!tpu.dma_semaphore, #tpu.memory_space<semaphore_mem>>
      tpu.enqueue_dma source(%18 : memref<1x512xf32, #tpu.memory_space<any>>) target(%19 : memref<1x512xf32, #tpu.memory_space<vmem>>) target_semaphore(%21 : memref<!tpu.dma_semaphore, #tpu.memory_space<semaphore_mem>>)
    }
    %c8_i32_2 = arith.constant 8 : i32
    %c0_i32_3 = arith.constant 0 : i32
    %c8_i32_4 = arith.constant 8 : i32
    %4 = arith.addi %c0_i32_3, %c8_i32_4 : i32
    %c1_i32_5 = arith.constant 1 : i32
    scf.for %arg8 = %c0_i32_3 to %4 step %c1_i32_5  : i32 {
      %c0_i32_12 = arith.constant 0 : i32
      %c0_i32_13 = arith.constant 0 : i32
      %c0_i32_14 = arith.constant 0 : i32
      %11 = tpu.memref_slice %arg4[%c0_i32_13, %c0_i32_14] : memref<32x512xf32, #tpu.memory_space<any>> -> memref<1x512xf32, #tpu.memory_space<any>>
      %c0_i32_15 = arith.constant 0 : i32
      %c0_i32_16 = arith.constant 0 : i32
      %12 = tpu.memref_slice %arg6[%c0_i32_15, %c0_i32_16] : memref<8x512xf32, #tpu.memory_space<vmem>> -> memref<1x512xf32, #tpu.memory_space<vmem>>
      %13 = tpu.memref_slice %arg7[%c0_i32_12] : memref<1x!tpu.dma_semaphore, #tpu.memory_space<semaphore_mem>> -> memref<1x!tpu.dma_semaphore, #tpu.memory_space<semaphore_mem>>
      %14 = tpu.memref_squeeze %13 : memref<1x!tpu.dma_semaphore, #tpu.memory_space<semaphore_mem>> -> memref<!tpu.dma_semaphore, #tpu.memory_space<semaphore_mem>>
      tpu.wait_dma2 semaphore(%14 : memref<!tpu.dma_semaphore, #tpu.memory_space<semaphore_mem>>) src(%11 : memref<1x512xf32, #tpu.memory_space<any>>) dst(%12 : memref<1x512xf32, #tpu.memory_space<vmem>>)
    }
    %c0 = arith.constant 0 : index
    %c0_6 = arith.constant 0 : index
    %5 = vector.load %arg6[%c0, %c0_6] : memref<8x512xf32, #tpu.memory_space<vmem>>, vector<8x512xf32>
    %c0_7 = arith.constant 0 : index
    %c0_8 = arith.constant 0 : index
    %6 = vector.load %arg3[%c0_7, %c0_8] : memref<8x512xf32, #tpu.memory_space<vmem>>, vector<8x512xf32>
    %7 = arith.addf %5, %6 : vector<8x512xf32>
    %c0_9 = arith.constant 0 : index
    %c0_10 = arith.constant 0 : index
    %c0_11 = arith.constant 0 : index
    %8 = vector.load %arg5[%c0_9, %c0_10, %c0_11] : memref<1x8x512xf32, #tpu.memory_space<vmem>>, vector<1x8x512xf32>
    %9 = vector.shape_cast %8 : vector<1x8x512xf32> to vector<8x512xf32>
    %10 = vector.shape_cast %7 : vector<8x512xf32> to vector<1x8x512xf32>
    tpu.vector_store %arg5[%c0_9, %c0_10, %c0_11], %10 {strides = array<i32>} : memref<1x8x512xf32, #tpu.memory_space<vmem>>, vector<1x8x512xf32>,
    return
  }
  func.func @transform_0(%arg0: i32, %arg1: i32, %arg2: memref<16xi32, #tpu.memory_space<smem>>) -> (i32, i32) {
    %c0_i32 = arith.constant 0 : i32
    %c0_i32_0 = arith.constant 0 : i32
    return %arg1, %c0_i32 : i32, i32
  }
  func.func @transform_2(%arg0: i32, %arg1: i32, %arg2: memref<16xi32, #tpu.memory_space<smem>>) -> (i32, i32, i32) {
    %c0_i32 = arith.constant 0 : i32
    %c0_i32_0 = arith.constant 0 : i32
    return %arg0, %arg1, %c0_i32 : i32, i32, i32
  }
}

</mosaic_0001>

<llo_original>
// kernel: tpu_custom_call.1
$region0: #{tpu_custom_call.1}
  #allocation0 [shape = 'u32[]', space=smem, size = 0x4, offset = 0x4, fixed_abs, tag = 'smem constant byte address 0x4 - core index']
  #allocation1 [shape = 'u32[144,128]{1,0:T(1,128)}', space=vmem, size = 0x12000, scoped, tag = 'internal scratch']
  #allocation2 [shape = 'f32[8,512]{1,0:T(8,128)}', space=vmem, size = 0x4000, scoped, tag = 'scratch operand']
  #allocation3 [shape = 's32[1]{0}', space=sflag, size = 0x4, scoped, tag = 'scratch operand']
  #allocation4 [shape = 's32[1]{0}', space=sflag, size = 0x4, scoped, tag = 'scoped memory for tpu_custom_call.1']
  #allocation5 [shape = 'u8[512]{0}', space=smem, size = 0x200, scoped, tag = 'prefetched SMEM operand 0']
  #allocation10 [shape = 's32[]', space=sflag, size = 0x4, offset = 0, fixed_abs, tag = 'sflag constant byte address 0x0 - dummy sync flag']
  %s0 = inlined_call_operand.hbm [shape: s32[16], index: 0, kind: input, shape index: {}]
  %s1 = inlined_call_operand.hbm [shape: f32[8,512], index: 1, kind: input, shape index: {}]
  %s2 = inlined_call_operand.hbm [shape: f32[32,512], index: 2, kind: input, shape index: {}]
  %s3 = inlined_call_operand.hbm [shape: f32[2,8,512], index: 3, kind: output, shape index: {}]
  %s4 = sld [smem:[#allocation0]]
  $region55: #{tpu_custom_call.1} parent=0
    _
  %s6 = ssub.s32 1, %s4
  %s7 = scalar_select 0, %s6, %s4
  %9 = dma.hbm_to_smem %s0, 16, [#allocation5], [#allocation4]
  %10 = dma.done [#allocation4], 16
  %11 = sfence
  $region1: #{tpu_custom_call.1} parent=0
    #allocation6 [shape = 'u8[16384]{0}', space=vmem, size = 0x4000, scoped, tag = 'input window, operand 1, single buffered']
    #allocation7 [shape = 's32[2]{0}', space=sflag, size = 0x8, scoped, tag = 'scoped memory for tpu_custom_call.1']
    #allocation8 [shape = 's32[2]{0}', space=sflag, size = 0x8, scoped, tag = 'scoped memory for tpu_custom_call.1']
    #allocation9 [shape = 'u8[32768]{0}', space=vmem, size = 0x8000, scoped, tag = 'output window, operand 0']
    %12 = vsyncpa [#allocation7], 0
    %13 = vsyncpa [#allocation8], 0
    %s14 = scalar_lea.sflag [#allocation8], 1
    %15 = vsyncpa %s14, 0
    loop: start=0, step=1, limit=4
    $region2: #{tpu_custom_call.1} parent=1 // loop_pre_header
      _
    $region3: #{tpu_custom_call.1} parent=1 // loop_header
      %s17 = sphi 0, %s21
      %p18 = scmp.ge.s32.totalorder %s17, 4
      %s24 = sphi 0, %s36
      %s25 = sphi 0, %s32
      %s26 = sphi 0, %s24
      %s27 = sphi 0, %s25
      %s28 = sphi 0, %s26
      %s29 = sphi 0, %s27
      %s39 = sphi 0, %s41
      %s42 = sphi 0, %s39
      %s43 = sphi 0, %s42
      %s59 = sphi 0, %s43
      %s67 = sphi 0, %s69
      %s70 = sphi 0, %s67
      %s71 = sphi 0, %s70
      %s87 = sphi 0, %s71
    $region4: #{tpu_custom_call.1} parent=1 // loop_header_branch
      %20 = sbr.rel (%p18) target = $region8
    $region5: #{tpu_custom_call.1} parent=1 // loop_body
      %s22 = ssub.s32 %s17, 1
      %s23 = ssub.s32 %s17, 2
      %s30 = sadd.s32 1, %s25
      %p31 = scmp.ge.s32.totalorder %s30, 1
      %s32 = scalar_select %p31, 0, %s30
      %s33 = sadd.s32 1, %s24
      %s34 = scalar_select %p31, %s33, %s24
      %p35 = scmp.ge.s32.totalorder %s34, 2
      %s36 = scalar_select %p35, 0, %s34
      %s37 = ssub.s32 %s25, %s32
      %p38 = scmp.eq.s32.totalorder %s37, 0
      %s40 = sadd.s32 %s39, 1
      %s41 = scalar_select %p38, %s39, %s40
      %p44 = pneg %p38
      %p45 = scmp.eq.s32.totalorder %s17, 1
      %p46 = por %p44, %p45
      %p47 = scmp.ne.s32.totalorder %s39, %s42
      %p48 = scmp.eq.s32.totalorder %s17, 0
      %p49 = por %p47, %p48
      %p50 = scmp.ne.s32.totalorder %s39, %s42
      %p51 = scmp.eq.s32.totalorder %s22, 1
      %p52 = por %p50, %p51
      %p53 = scmp.ne.s32.totalorder %s42, %s43
      %p54 = scmp.eq.s32.totalorder %s22, 0
      %p55 = por %p53, %p54
      %p56 = scmp.ne.s32.totalorder %s42, %s43
      %p57 = scmp.eq.s32.totalorder %s23, 1
      %p58 = por %p56, %p57
      %p60 = scmp.ne.s32.totalorder %s43, %s59
      %p61 = scmp.eq.s32.totalorder %s23, 0
      %p62 = por %p60, %p61
      %s63 = ssub.s32 %s24, %s36
      %s64 = ssub.s32 %s25, %s32
      %s65 = sor.u32 %s63, %s64
      %p66 = scmp.eq.s32.totalorder %s65, 0
      %s68 = sadd.s32 %s67, 1
      %s69 = scalar_select %p66, %s67, %s68
      %p72 = pneg %p66
      %p73 = scmp.eq.s32.totalorder %s17, 1
      %p74 = por %p72, %p73
      %p75 = scmp.ne.s32.totalorder %s67, %s70
      %p76 = scmp.eq.s32.totalorder %s17, 0
      %p77 = por %p75, %p76
      %p78 = scmp.ne.s32.totalorder %s67, %s70
      %p79 = scmp.eq.s32.totalorder %s22, 1
      %p80 = por %p78, %p79
      %p81 = scmp.ne.s32.totalorder %s70, %s71
      %p82 = scmp.eq.s32.totalorder %s22, 0
      %p83 = por %p81, %p82
      %p84 = scmp.ne.s32.totalorder %s70, %s71
      %p85 = scmp.eq.s32.totalorder %s23, 1
      %p86 = por %p84, %p85
      %p88 = scmp.ne.s32.totalorder %s71, %s87
      %p89 = scmp.eq.s32.totalorder %s23, 0
      %p90 = por %p88, %p89
      %p91 = scmp.le.s32.totalorder 1, %s17
      %p92 = scmp.lt.s32.totalorder %s17, 3
      %p93 = pnand %p91, %p92
      %p94 = pneg %p93
      // Predicated region
      $region9: #{tpu_custom_call.1} parent=5 // pred_check
        _
      $region10: #{tpu_custom_call.1} parent=5 // pred_check_branch
        %96 = sbr.rel (%p93) target = $region12
      $region11: #{tpu_custom_call.1} parent=5 // pred_region
        %s97 = ssub.s32 %s17, 1
        // Predicated region
        $region13: #{tpu_custom_call.1} parent=11 // pred_check
          %p98 = pneg %p55
        $region14: #{tpu_custom_call.1} parent=11 // pred_check_branch
          %100 = sbr.rel (%p98) target = $region16
        $region15: #{tpu_custom_call.1} parent=11 // pred_region
          %s102 = ssub.s32 512, 512
          %103 = vsyncadd [#allocation7], %s102
          %s104 = smul.addr %s27, 4
          %s105 = smul.addr %s104, 128
          %s106 = scalar_lea.hbm %s1, %s105
          %s108 = sshll.u32 [#allocation6], 4
          %s109 = int_to_ptr.vmem [resolvable:$true] %s108
          %111 = dma.hbm_to_vmem [thread:$0]  %s106, 512, %s109, [#allocation7]
        $region16: #{tpu_custom_call.1} parent=11 // pred_fallthru
          _
      $region12: #{tpu_custom_call.1} parent=5 // pred_fallthru
        _
      %p112 = scmp.lt.s32.totalorder %s17, 2
      // Predicated region
      $region17: #{tpu_custom_call.1} parent=5 // pred_check
        %p113 = pneg %p112
      $region18: #{tpu_custom_call.1} parent=5 // pred_check_branch
        %115 = sbr.rel (%p113) target = $region20
      $region19: #{tpu_custom_call.1} parent=5 // pred_region
        _
      $region20: #{tpu_custom_call.1} parent=5 // pred_fallthru
        _
      %p116 = scmp.le.s32.totalorder 1, %s17
      %p117 = scmp.lt.s32.totalorder %s17, 3
      %p118 = pnand %p116, %p117
      %p119 = pneg %p118
      // Predicated region
      $region21: #{tpu_custom_call.1} parent=5 // pred_check
        _
      $region22: #{tpu_custom_call.1} parent=5 // pred_check_branch
        %121 = sbr.rel (%p118) target = $region24
      $region23: #{tpu_custom_call.1} parent=5 // pred_region
        %s122 = ssub.s32 %s17, 1
        // Predicated region
        $region25: #{tpu_custom_call.1} parent=23 // pred_check
          %p123 = pneg %p55
        $region26: #{tpu_custom_call.1} parent=23 // pred_check_branch
          %125 = sbr.rel (%p123) target = $region28
        $region27: #{tpu_custom_call.1} parent=23 // pred_region
          %126 = dma.done [#allocation7], 512
        $region28: #{tpu_custom_call.1} parent=23 // pred_fallthru
          _
        %p127 = pneg %p55
        %p128 = pneg %p52
        %p129 = pneg %p83
        %p130 = pneg %p80
        %s131 = sand.u32 %s70, 1
        %s132 = scalar_lea.sflag [#allocation8], %s131
        %s133 = sand.u32 %s70, 1
        %s134 = smul.addr %s133, 32
        %s135 = scalar_lea.vmem [#allocation9], %s134
        %s136 = smul.u32 %s26, 8
        %s137 = smul.u32 %s27, 8
        %s138 = sadd.s32 %s136, %s137
        loop: start=0, step=1, limit=8
        $region29: #{tpu_custom_call.1} parent=23 // loop_pre_header
          _
        $region30: #{tpu_custom_call.1} parent=23 // loop_header
          %s140 = sphi 0, %s144
          %p141 = scmp.ge.s32.totalorder %s140, 8
        $region31: #{tpu_custom_call.1} parent=23 // loop_header_branch
          %143 = sbr.rel (%p141) target = $region35
        $region32: #{tpu_custom_call.1} parent=23 // loop_body
          %s145 = sadd.s32 %s138, %s140
          %s146 = sld [smem:[#allocation5 + %s145]]
          %p147 = scmp.gt.s32.totalorder %s146, 0
          %s148 = scalar_select %p147, %s146, 0
          %p149 = scmp.lt.s32.totalorder %s148, 31
          %s150 = scalar_select %p149, %s148, 31
          %s151 = sshrl.u32 %s150, 3
          %s152 = sand.u32 %s150, 7
          %s153 = smul.u32 %s151, 32
          %s154 = sadd.s32 %s152, %s153
          %s155 = smul.addr %s154, 16
          %s156 = scalar_lea.hbm %s2, %s155
          %s157 = sshrl.u32 %s140, 3
          %s158 = sand.u32 %s140, 7
          %s159 = smul.u32 %s157, 32
          %s160 = sadd.s32 %s158, %s159
          %s161 = scalar_lea.vmem [#allocation2], %s160
          %s163 = sshll.u32 %s161, 4
          %s164 = int_to_ptr.vmem [resolvable:$true] %s163
          %166 = dma.hbm_to_vmem [thread:$0]  %s156, 64, %s164, [#allocation3], 128, 128, 1
        $region33: #{tpu_custom_call.1} parent=23 // loop_footer
          %s144 = sadd.s32 1, %s140
        $region34: #{tpu_custom_call.1} parent=23 // loop_footer_branch
          %139 = sbr.rel target = $region30
        $region35: #{tpu_custom_call.1} parent=23 // loop_exit
          _
        loop: start=0, step=1, limit=8
        $region36: #{tpu_custom_call.1} parent=23 // loop_pre_header
          _
        $region37: #{tpu_custom_call.1} parent=23 // loop_header
          %s168 = sphi 0, %s172
          %p169 = scmp.ge.s32.totalorder %s168, 8
        $region38: #{tpu_custom_call.1} parent=23 // loop_header_branch
          %171 = sbr.rel (%p169) target = $region42
        $region39: #{tpu_custom_call.1} parent=23 // loop_body
          %s173 = smul.u32 1, 4
          %s174 = sshll.u32 %s173, 4
          %175 = dma.done [#allocation3], %s174
        $region40: #{tpu_custom_call.1} parent=23 // loop_footer
          %s172 = sadd.s32 1, %s168
        $region41: #{tpu_custom_call.1} parent=23 // loop_footer_branch
          %167 = sbr.rel target = $region37
        $region42: #{tpu_custom_call.1} parent=23 // loop_exit
          _
        %v176 = vld [vmem:[#allocation2] sm:$0xff]
        %v177 = vld [vmem:[#allocation2 + $0x8] sm:$0xff]
        %v178 = vld [vmem:[#allocation2 + $0x10] sm:$0xff]
        %v179 = vld [vmem:[#allocation2 + $0x18] sm:$0xff]
        %v180 = vld [vmem:[#allocation6] sm:$0xff]
        %v181 = vld [vmem:[#allocation6 + $0x8] sm:$0xff]
        %v182 = vld [vmem:[#allocation6 + $0x10] sm:$0xff]
        %v183 = vld [vmem:[#allocation6 + $0x18] sm:$0xff]
        %v184 = vadd.f32 %v176, %v180
        %v185 = vadd.f32 %v177, %v181
        %v186 = vadd.f32 %v178, %v182
        %v187 = vadd.f32 %v179, %v183
        %188 = vst [vmem:[%s135] sm:$0xff] %v184
        %189 = vst [vmem:[%s135 + $0x8] sm:$0xff] %v185
        %190 = vst [vmem:[%s135 + $0x10] sm:$0xff] %v186
        %191 = vst [vmem:[%s135 + $0x18] sm:$0xff] %v187
        %s192 = sand.u32 %s70, 1
        %s193 = scalar_lea.sflag [#allocation8], %s192
        %s194 = sand.u32 %s70, 1
        %s195 = smul.addr %s194, 32
        %s196 = scalar_lea.vmem [#allocation9], %s195
        // Predicated region
        $region43: #{tpu_custom_call.1} parent=23 // pred_check
          %p197 = pneg %p80
        $region44: #{tpu_custom_call.1} parent=23 // pred_check_branch
          %199 = sbr.rel (%p197) target = $region46
        $region45: #{tpu_custom_call.1} parent=23 // pred_region
          %s201 = ssub.s32 512, 512
          %202 = vsyncadd %s193, %s201
          %s203 = smul.addr %s27, 4
          %s204 = smul.addr %s26, 4
          %s205 = sadd.s32 %s203, %s204
          %s206 = smul.addr %s205, 128
          %s207 = scalar_lea.hbm %s3, %s206
          %s209 = sshll.u32 %s196, 4
          %s210 = int_to_ptr.vmem [resolvable:$true] %s209
          %212 = dma.vmem_to_hbm [thread:$0]  %s210, 512, %s207, %s193
        $region46: #{tpu_custom_call.1} parent=23 // pred_fallthru
          _
      $region24: #{tpu_custom_call.1} parent=5 // pred_fallthru
        _
      %p213 = scmp.le.s32.totalorder 2, %s17
      // Predicated region
      $region47: #{tpu_custom_call.1} parent=5 // pred_check
        %p214 = pneg %p213
      $region48: #{tpu_custom_call.1} parent=5 // pred_check_branch
        %216 = sbr.rel (%p214) target = $region50
      $region49: #{tpu_custom_call.1} parent=5 // pred_region
        %s217 = ssub.s32 %s17, 2
        // Predicated region
        $region51: #{tpu_custom_call.1} parent=49 // pred_check
          %p218 = pneg %p86
        $region52: #{tpu_custom_call.1} parent=49 // pred_check_branch
          %220 = sbr.rel (%p218) target = $region54
        $region53: #{tpu_custom_call.1} parent=49 // pred_region
          %s221 = sand.u32 %s71, 1
          %s222 = scalar_lea.sflag [#allocation8], %s221
          %s223 = sand.u32 %s71, 1
          %s224 = smul.addr %s223, 32
          %s225 = scalar_lea.vmem [#allocation9], %s224
          %226 = dma.done %s222, 512
        $region54: #{tpu_custom_call.1} parent=49 // pred_fallthru
          _
      $region50: #{tpu_custom_call.1} parent=5 // pred_fallthru
        _
    $region6: #{tpu_custom_call.1} parent=1 // loop_footer
      %s21 = sadd.s32 1, %s17
    $region7: #{tpu_custom_call.1} parent=1 // loop_footer_branch
      %16 = sbr.rel target = $region3
    $region8: #{tpu_custom_call.1} parent=1 // loop_exit
      _
    %227 = vsyncpa [#allocation7], 1
    %s228 = scalar_lea.sflag [#allocation7], 1
    %229 = vsyncpa %s228, 1
    %230 = vsyncpa [#allocation8], 1
    %s231 = scalar_lea.sflag [#allocation8], 1
    %232 = vsyncpa %s231, 1
  %233 = vsyncmov [#allocation3]
  %s234 = vpop.sfrf %233
  %p235 = scmp.eq.s32.totalorder %s234, 0
  %p236 = pneg %p235
  %238 = shalt.err (%p236)

</llo_original>
